<compile_context>
chip_gen: v6e
topology: v6e:2x2x1
jax: 0.10.0
libtpu: 0.0.40
codegen_flags: <defaults>
</compile_context>

<pallas_src>
import functools

import jax
import jax.numpy as jnp
from jax.experimental import pallas as pl
from jax.experimental.pallas import tpu as pltpu

_MiB = 1024 * 1024


def _sigmoid(z):
    # exact sigmoid via EUP tanh: 1/(1+exp(-z)) == 0.5*tanh(z/2) + 0.5
    return 0.5 * jnp.tanh(0.5 * z) + 0.5


# ----------------------------- kernels ----------------------------------------


def _fused_kernel(x_ref, w1_ref, b1_ref, w2_ref, b2_ref, wc_ref, o_ref, *, inv_s):
    """Single pass: pool -> excitation MLP -> spatial SE -> combined scale.

    The x block is the full (C, S) slab of one batch element, so x is read from
    HBM exactly once.
    """
    x = x_ref[0].astype(jnp.float32)                                    # (C, S)
    pooled = jnp.sum(x, axis=1, keepdims=True) * inv_s                  # (C, 1)
    h = jnp.dot(w1_ref[...], pooled,
                preferred_element_type=jnp.float32) + b1_ref[...]       # (hid, 1)
    h = jnp.maximum(h, 0.0)
    z = jnp.dot(w2_ref[...], h,
                preferred_element_type=jnp.float32) + b2_ref[...]       # (C, 1)
    chn = _sigmoid(z)
    spa = _sigmoid(jnp.dot(wc_ref[...], x,
                           preferred_element_type=jnp.float32))         # (1, S)
    # x*chn_se + x*spa_se == x * (chn + spa): one VPU multiply per element.
    o_ref[0] = (x * (chn + spa)).astype(o_ref.dtype)


def _pool_kernel(x_ref, sums_ref, acc_ref, *, n_s_g, ts, s_total, ragged):
    """Two-pass / pass 1: tiled spatial sums.

    Emits per-(batch, spatial-group) partial sums; the excitation MLP runs
    outside the kernel. A ragged last tile is lane-masked to zero.
    """
    s_idx = pl.program_id(2)

    @pl.when(s_idx == 0)
    def _():
        acc_ref[...] = jnp.zeros_like(acc_ref)

    x = x_ref[0].astype(jnp.float32)                                    # (C, TS)
    if ragged:
        start = (pl.program_id(1) * n_s_g + s_idx) * ts
        lane = jax.lax.broadcasted_iota(jnp.int32, (1, ts), 1)
        x = jnp.where(lane + start < s_total, x, 0.0)
    acc_ref[...] += jnp.sum(x, axis=1, keepdims=True)

    @pl.when(s_idx == n_s_g - 1)
    def _():
        sums_ref[0, 0] = acc_ref[...]


def _apply_kernel(x_ref, chn_ref, wc_ref, o_ref):
    """Two-pass / pass 2: spatial SE (1x1 conv + sigmoid) + combined scaling.

    Lane-dense (C, TS) output tiles; out-of-bounds lanes of a ragged last tile
    are dropped by the pipeline on write-back.
    """
    x = x_ref[0].astype(jnp.float32)                                    # (C, TS)
    spa = _sigmoid(jnp.dot(wc_ref[...], x,
                           preferred_element_type=jnp.float32))         # (1, TS)
    o_ref[0] = (x * (chn_ref[0] + spa)).astype(o_ref.dtype)


# ----------------------------- tiling / budgets --------------------------------


def _vmem_budgets():
    """(physical VMEM, scoped limit, fused-path budget) in bytes, per generation."""
    try:
        phys = int(pltpu.get_tpu_info().vmem_capacity_bytes)
    except Exception:
        phys = 64 * _MiB  # conservative (v7x-sized VMEM) if no TPU info available
    vmem_limit = min((phys * 3) // 4, 96 * _MiB)   # ~96 MiB on v5e/v6e, ~48 MiB on v7x
    fused_budget = 40 * _MiB if phys >= 100 * _MiB else 20 * _MiB
    return phys, vmem_limit, fused_budget


def _pick_spatial_tile(S, bytes_per_lane, budget_bytes):
    """Largest spatial tile whose buffered VMEM footprint fits the budget:
    the full extent S if it fits, otherwise a multiple of 128 (a ragged last
    tile is handled with a lane mask / dropped OOB stores)."""
    max_ts = budget_bytes // max(bytes_per_lane, 1)
    if max_ts >= S:
        return S
    return max(int(max_ts // 128) * 128, 128)


# ----------------------------- wrapper -----------------------------------------


def scse_block(x_nchw, w1, b1, w2, b2, w_conv, *, use_fused=None, tile_budget_bytes=None):
    """SCSEBlock forward: x * sigmoid(MLP(avgpool(x))) + x * sigmoid(conv1x1(x)).

    x_nchw : (B, C, H, W) float32 or bfloat16 (I/O dtype preserved; compute in f32)
    w1     : (C//r, C)    first Linear weight (PyTorch convention)
    b1     : (C//r,)
    w2     : (C, C//r)
    b2     : (C,)
    w_conv : (1, C, 1, 1) 1x1 Conv2d weight, no bias
    returns (B, C, H, W) in x's dtype
    """
    B, C, H, W = x_nchw.shape
    S = H * W
    hid = w1.shape[0]

    # NCHW -> (B, C, S): pure reshape (same memory layout), spatial on the lane axis.
    x = x_nchw.reshape(B, C, S)
    if x.dtype not in (jnp.float32, jnp.bfloat16):
        x = x.astype(jnp.float32)
    io_dtype = x.dtype
    itemsize = jnp.dtype(io_dtype).itemsize

    # Small parameters in f32, oriented so the kernels need no transposes.
    w1f = jnp.asarray(w1, jnp.float32)                    # (hid, C)
    w2f = jnp.asarray(w2, jnp.float32)                    # (C, hid)
    b1f = jnp.asarray(b1, jnp.float32)                    # (hid,)
    b2f = jnp.asarray(b2, jnp.float32)                    # (C,)
    wc = jnp.asarray(w_conv, jnp.float32).reshape(1, C)   # (1, C) 1x1 conv as a row

    _, vmem_limit, fused_budget = _vmem_budgets()

    slab_bytes = C * S * itemsize
    weight_bytes = 4 * (2 * hid * C + hid + 2 * C)
    # double-buffered in + out slabs, an f32 working copy, double-buffered weights
    fused_bytes = 4 * slab_bytes + 2 * C * S * 4 + 2 * weight_bytes
    if use_fused is None:
        use_fused = fused_bytes <= fused_budget

    # ---------------- fused single-pass path ----------------
    if use_fused:
        out = pl.pallas_call(
            functools.partial(_fused_kernel, inv_s=1.0 / float(S)),
            out_shape=jax.ShapeDtypeStruct((B, C, S), io_dtype),
            grid_spec=pltpu.PrefetchScalarGridSpec(
                num_scalar_prefetch=0,
                grid=(B,),
                in_specs=[
                    pl.BlockSpec((1, C, S), lambda b: (b, 0, 0)),   # x slab
                    pl.BlockSpec((hid, C), lambda b: (0, 0)),       # W1 (resident)
                    pl.BlockSpec((hid, 1), lambda b: (0, 0)),       # b1
                    pl.BlockSpec((C, hid), lambda b: (0, 0)),       # W2
                    pl.BlockSpec((C, 1), lambda b: (0, 0)),         # b2
                    pl.BlockSpec((1, C), lambda b: (0, 0)),         # conv weight
                ],
                out_specs=pl.BlockSpec((1, C, S), lambda b: (b, 0, 0)),
            ),
            compiler_params=pltpu.CompilerParams(
                dimension_semantics=("parallel",),
                vmem_limit_bytes=vmem_limit,
            ),
        )(x, w1f, b1f.reshape(hid, 1), w2f, b2f.reshape(C, 1), wc)
        return out.reshape(B, C, H, W)

    # ---------------- two-pass streaming fallback ----------------
    if tile_budget_bytes is None:
        tile_budget_bytes = vmem_limit // 2   # leave headroom for in-kernel temporaries

    # pass 1 streams only the input (2 buffers/lane); pass 2 streams input + output (4).
    ts1 = _pick_spatial_tile(S, 2 * C * itemsize, tile_budget_bytes)
    ts2 = _pick_spatial_tile(S, 4 * C * itemsize, tile_budget_bytes)

    # Megacore coverage for pass 1 at B == 1: make sure there are >= 2 parallel units.
    if B == 1 and ts1 >= S and S > 256:
        ts1 = max(128, ((S // 2) // 128) * 128)

    n_s1 = int(pl.cdiv(S, ts1))
    ragged1 = (S % ts1) != 0
    n_groups = 2 if (n_s1 >= 2 and n_s1 % 2 == 0) else 1
    n_s_g = n_s1 // n_groups

    # Pass 1: tiled spatial sums -> (B, G, C, 1) partial sums.
    # NOTE: no weight blocks in VMEM here (the MLP is hoisted out); a Buffered(1)
    # pipeline_mode for the resident conv weight in pass 2 was considered but its
    # footprint is negligible.
    partial_sums = pl.pallas_call(
        functools.partial(_pool_kernel, n_s_g=n_s_g, ts=ts1, s_total=S, ragged=ragged1),
        out_shape=jax.ShapeDtypeStruct((B, n_groups, C, 1), jnp.float32),
        grid_spec=pltpu.PrefetchScalarGridSpec(
            num_scalar_prefetch=0,
            grid=(B, n_groups, n_s_g),
            in_specs=[pl.BlockSpec((1, C, ts1),
                                   lambda b, g, s: (b, 0, g * n_s_g + s))],
            out_specs=pl.BlockSpec((1, 1, C, 1), lambda b, g, s: (b, g, 0, 0)),
            scratch_shapes=[pltpu.VMEM((C, 1), jnp.float32)],
        ),
        compiler_params=pltpu.CompilerParams(
            dimension_semantics=("parallel", "parallel", "arbitrary"),
            vmem_limit_bytes=vmem_limit,
        ),
    )(x)

    # Tiny excitation MLP outside the kernel (negligible FLOPs, proper batched shapes).
    pooled = partial_sums.sum(axis=1)[..., 0] * (1.0 / float(S))        # (B, C)
    hdn = jnp.maximum(pooled @ w1f.T + b1f, 0.0)                        # (B, hid)
    chn = jax.nn.sigmoid(hdn @ w2f.T + b2f).reshape(B, C, 1)            # (B, C, 1)

    # Pass 2: spatial SE + combined scaling, lane-dense (B, C, S) output.
    n_s2 = int(pl.cdiv(S, ts2))
    out = pl.pallas_call(
        _apply_kernel,
        out_shape=jax.ShapeDtypeStruct((B, C, S), io_dtype),
        grid_spec=pltpu.PrefetchScalarGridSpec(
            num_scalar_prefetch=0,
            grid=(B, n_s2),
            in_specs=[
                pl.BlockSpec((1, C, ts2), lambda b, s: (b, 0, s)),      # x tile
                pl.BlockSpec((1, C, 1), lambda b, s: (b, 0, 0)),        # channel scale
                pl.BlockSpec((1, C), lambda b, s: (0, 0)),              # conv weight
            ],
            out_specs=pl.BlockSpec((1, C, ts2), lambda b, s: (b, 0, s)),
        ),
        compiler_params=pltpu.CompilerParams(
            dimension_semantics=("parallel", "parallel"),
            vmem_limit_bytes=vmem_limit,
        ),
    )(x, chn, wc)

    return out.reshape(B, C, H, W)


# ----------------------------- reference & test --------------------------------


def _reference(x, w1, b1, w2, b2, w_conv):
    # Pure-JAX reference mirroring the PyTorch forward (NCHW), f32 math.
    B, C, H, W = x.shape
    xf = x.astype(jnp.float32)
    pooled = jnp.mean(xf, axis=(2, 3))                                  # (B, C)
    h = jnp.maximum(pooled @ jnp.asarray(w1, jnp.float32).T + jnp.asarray(b1, jnp.float32), 0.0)
    chn = jax.nn.sigmoid(h @ jnp.asarray(w2, jnp.float32).T
                         + jnp.asarray(b2, jnp.float32)).reshape(B, C, 1, 1)
    spa = jax.nn.sigmoid(jnp.einsum("bchw,c->bhw", xf,
                                    jnp.asarray(w_conv, jnp.float32).reshape(C)))[:, None]
    return xf * chn + xf * spa


if __name__ == "__main__":
    def make_inputs(key, B, C, H, W, reduction=16):
        hid = max(C // reduction, 1)
        kx, k1, kb1, k2, kb2, kc = jax.random.split(key, 6)
        x = jax.random.normal(kx, (B, C, H, W), dtype=jnp.float32)
        w1 = jax.random.normal(k1, (hid, C), dtype=jnp.float32) * 0.1
        b1 = jax.random.normal(kb1, (hid,), dtype=jnp.float32) * 0.1
        w2 = jax.random.normal(k2, (C, hid), dtype=jnp.float32) * 0.1
        b2 = jax.random.normal(kb2, (C,), dtype=jnp.float32) * 0.1
        wc = jax.random.normal(kc, (1, C, 1, 1), dtype=jnp.float32) * 0.1
        return x, w1, b1, w2, b2, wc

    # 1) fused single-pass path (default for small slabs)
    x, w1, b1, w2, b2, wc = make_inputs(jax.random.PRNGKey(0), B=2, C=32, H=16, W=16)
    out = jax.block_until_ready(scse_block(x, w1, b1, w2, b2, wc))
    ref = _reference(x, w1, b1, w2, b2, wc)
    assert out.shape == x.shape and out.dtype == x.dtype
    assert jnp.allclose(out, ref, atol=2e-5, rtol=2e-5)

    # 2) forced two-pass streaming path on the same data
    out2 = jax.block_until_ready(scse_block(x, w1, b1, w2, b2, wc, use_fused=False))
    assert jnp.allclose(out2, ref, atol=2e-5, rtol=2e-5)

    # 3) forced two-pass path with a tiny tile budget and ragged spatial size
    #    (S = 24*23 = 552, no multiple-of-128 divisor -> masked ragged last tile)
    xr, w1r, b1r, w2r, b2r, wcr = make_inputs(jax.random.PRNGKey(1), B=2, C=32, H=24, W=23)
    out3 = jax.block_until_ready(
        scse_block(xr, w1r, b1r, w2r, b2r, wcr, use_fused=False,
                   tile_budget_bytes=96 * 1024))
    ref3 = _reference(xr, w1r, b1r, w2r, b2r, wcr)
    assert jnp.allclose(out3, ref3, atol=2e-5, rtol=2e-5)

    # 4) bf16 I/O path (halves HBM traffic; compute still f32)
    xb = x.astype(jnp.bfloat16)
    out4 = jax.block_until_ready(scse_block(xb, w1, b1, w2, b2, wc))
    ref4 = _reference(xb, w1, b1, w2, b2, wc)
    assert out4.dtype == jnp.bfloat16
    assert jnp.allclose(out4.astype(jnp.float32), ref4, atol=3e-2, rtol=3e-2)

    print("KERNEL_OK")
</pallas_src>

<mosaic_0001>
module attributes {stable_mosaic.version = 11 : i64} {
  func.func @_fused_kernel(%arg0: i32, %arg1: memref<1x32x256xf32, #tpu.memory_space<vmem>>, %arg2: memref<2x32xf32, #tpu.memory_space<vmem>>, %arg3: memref<2x1xf32, #tpu.memory_space<vmem>>, %arg4: memref<32x2xf32, #tpu.memory_space<vmem>>, %arg5: memref<32x1xf32, #tpu.memory_space<vmem>>, %arg6: memref<1x32xf32, #tpu.memory_space<vmem>>, %arg7: memref<1x32x256xf32, #tpu.memory_space<vmem>>) attributes {dimension_semantics = [#tpu.dimension_semantics<parallel>], iteration_bounds = array<i64: 2>, scalar_prefetch = 0 : i64, scratch_operands = 0 : i64, tpu.core_type = #tpu.core_type<tc>, window_params = [{transform_indices = @transform_0, window_bounds = array<i64: 1, 32, 256>}, {pipeline_mode = #tpu.pipeline_mode<synchronous>, transform_indices = @transform_1, window_bounds = array<i64: 2, 32>}, {pipeline_mode = #tpu.pipeline_mode<synchronous>, transform_indices = @transform_2, window_bounds = array<i64: 2, 1>}, {pipeline_mode = #tpu.pipeline_mode<synchronous>, transform_indices = @transform_3, window_bounds = array<i64: 32, 2>}, {pipeline_mode = #tpu.pipeline_mode<synchronous>, transform_indices = @transform_4, window_bounds = array<i64: 32, 1>}, {pipeline_mode = #tpu.pipeline_mode<synchronous>, transform_indices = @transform_5, window_bounds = array<i64: 1, 32>}, {transform_indices = @transform_6, window_bounds = array<i64: 1, 32, 256>}]} {
    %c0 = arith.constant 0 : index
    %c0_0 = arith.constant 0 : index
    %c0_1 = arith.constant 0 : index
    %0 = vector.load %arg1[%c0, %c0_0, %c0_1] : memref<1x32x256xf32, #tpu.memory_space<vmem>>, vector<1x32x256xf32>
    %1 = vector.shape_cast %0 : vector<1x32x256xf32> to vector<32x256xf32>
    %cst = arith.constant dense<0.000000e+00> : vector<32xf32>
    %2 = vector.multi_reduction <add>, %1, %cst [1] : vector<32x256xf32> to vector<32xf32>
    %3 = vector.shape_cast %2 : vector<32xf32> to vector<32x1xf32>
    %cst_2 = arith.constant 3.906250e-03 : f32
    %4 = vector.broadcast %cst_2 : f32 to vector<32x1xf32>
    %5 = arith.mulf %3, %4 : vector<32x1xf32>
    %c0_3 = arith.constant 0 : index
    %c0_4 = arith.constant 0 : index
    %6 = vector.load %arg2[%c0_3, %c0_4] : memref<2x32xf32, #tpu.memory_space<vmem>>, vector<2x32xf32>
    %cst_5 = arith.constant dense<0.000000e+00> : vector<2x1xf32>
    %7 = tpu.matmul %6, %5, %cst_5 {dimension_numbers = #tpu.dot_dimension_numbers<[1], [0], [0], [1], [0, 0, 1, 1], [], []>} : vector<2x32xf32>, vector<32x1xf32>, vector<2x1xf32> -> vector<2x1xf32>
    %c0_6 = arith.constant 0 : index
    %c0_7 = arith.constant 0 : index
    %8 = vector.load %arg3[%c0_6, %c0_7] : memref<2x1xf32, #tpu.memory_space<vmem>>, vector<2x1xf32>
    %9 = arith.addf %7, %8 : vector<2x1xf32>
    %cst_8 = arith.constant 0.000000e+00 : f32
    %10 = vector.broadcast %cst_8 : f32 to vector<2x1xf32>
    %11 = arith.maximumf %9, %10 : vector<2x1xf32>
    %c0_9 = arith.constant 0 : index
    %c0_10 = arith.constant 0 : index
    %12 = vector.load %arg4[%c0_9, %c0_10] : memref<32x2xf32, #tpu.memory_space<vmem>>, vector<32x2xf32>
    %cst_11 = arith.constant dense<0.000000e+00> : vector<32x1xf32>
    %13 = tpu.matmul %12, %11, %cst_11 {dimension_numbers = #tpu.dot_dimension_numbers<[1], [0], [0], [1], [0, 0, 1, 1], [], []>} : vector<32x2xf32>, vector<2x1xf32>, vector<32x1xf32> -> vector<32x1xf32>
    %c0_12 = arith.constant 0 : index
    %c0_13 = arith.constant 0 : index
    %14 = vector.load %arg5[%c0_12, %c0_13] : memref<32x1xf32, #tpu.memory_space<vmem>>, vector<32x1xf32>
    %15 = arith.addf %13, %14 : vector<32x1xf32>
    %cst_14 = arith.constant 5.000000e-01 : f32
    %16 = vector.broadcast %cst_14 : f32 to vector<32x1xf32>
    %17 = arith.mulf %16, %15 : vector<32x1xf32>
    %18 = math.tanh %17 : vector<32x1xf32>
    %cst_15 = arith.constant 5.000000e-01 : f32
    %19 = vector.broadcast %cst_15 : f32 to vector<32x1xf32>
    %20 = arith.mulf %19, %18 : vector<32x1xf32>
    %cst_16 = arith.constant 5.000000e-01 : f32
    %21 = vector.broadcast %cst_16 : f32 to vector<32x1xf32>
    %22 = arith.addf %20, %21 : vector<32x1xf32>
    %c0_17 = arith.constant 0 : index
    %c0_18 = arith.constant 0 : index
    %23 = vector.load %arg6[%c0_17, %c0_18] : memref<1x32xf32, #tpu.memory_space<vmem>>, vector<1x32xf32>
    %cst_19 = arith.constant dense<0.000000e+00> : vector<1x256xf32>
    %24 = tpu.matmul %23, %1, %cst_19 {dimension_numbers = #tpu.dot_dimension_numbers<[1], [0], [0], [1], [0, 0, 1, 1], [], []>} : vector<1x32xf32>, vector<32x256xf32>, vector<1x256xf32> -> vector<1x256xf32>
    %cst_20 = arith.constant 5.000000e-01 : f32
    %25 = vector.broadcast %cst_20 : f32 to vector<1x256xf32>
    %26 = arith.mulf %25, %24 : vector<1x256xf32>
    %27 = math.tanh %26 : vector<1x256xf32>
    %cst_21 = arith.constant 5.000000e-01 : f32
    %28 = vector.broadcast %cst_21 : f32 to vector<1x256xf32>
    %29 = arith.mulf %28, %27 : vector<1x256xf32>
    %cst_22 = arith.constant 5.000000e-01 : f32
    %30 = vector.broadcast %cst_22 : f32 to vector<1x256xf32>
    %31 = arith.addf %29, %30 : vector<1x256xf32>
    %32 = vector.broadcast %22 : vector<32x1xf32> to vector<32x256xf32>
    %33 = vector.broadcast %31 : vector<1x256xf32> to vector<32x256xf32>
    %34 = arith.addf %32, %33 : vector<32x256xf32>
    %35 = arith.mulf %1, %34 : vector<32x256xf32>
    %c0_23 = arith.constant 0 : index
    %c0_24 = arith.constant 0 : index
    %c0_25 = arith.constant 0 : index
    %36 = vector.load %arg7[%c0_23, %c0_24, %c0_25] : memref<1x32x256xf32, #tpu.memory_space<vmem>>, vector<1x32x256xf32>
    %37 = vector.shape_cast %36 : vector<1x32x256xf32> to vector<32x256xf32>
    %38 = vector.shape_cast %35 : vector<32x256xf32> to vector<1x32x256xf32>
    tpu.vector_store %arg7[%c0_23, %c0_24, %c0_25], %38 {strides = array<i32>} : memref<1x32x256xf32, #tpu.memory_space<vmem>>, vector<1x32x256xf32>,
    return
  }
  func.func @transform_0(%arg0: i32) -> (i32, i32, i32) {
    %c0_i32 = arith.constant 0 : i32
    %c0_i32_0 = arith.constant 0 : i32
    %c0_i32_1 = arith.constant 0 : i32
    return %arg0, %c0_i32, %c0_i32_0 : i32, i32, i32
  }
  func.func @transform_1(%arg0: i32) -> (i32, i32) {
    %c0_i32 = arith.constant 0 : i32
    %c0_i32_0 = arith.constant 0 : i32
    %c0_i32_1 = arith.constant 0 : i32
    return %c0_i32, %c0_i32_0 : i32, i32
  }
  func.func @transform_2(%arg0: i32) -> (i32, i32) {
    %c0_i32 = arith.constant 0 : i32
    %c0_i32_0 = arith.constant 0 : i32
    %c0_i32_1 = arith.constant 0 : i32
    return %c0_i32, %c0_i32_0 : i32, i32
  }
  func.func @transform_3(%arg0: i32) -> (i32, i32) {
    %c0_i32 = arith.constant 0 : i32
    %c0_i32_0 = arith.constant 0 : i32
    %c0_i32_1 = arith.constant 0 : i32
    return %c0_i32, %c0_i32_0 : i32, i32
  }
  func.func @transform_4(%arg0: i32) -> (i32, i32) {
    %c0_i32 = arith.constant 0 : i32
    %c0_i32_0 = arith.constant 0 : i32
    %c0_i32_1 = arith.constant 0 : i32
    return %c0_i32, %c0_i32_0 : i32, i32
  }
  func.func @transform_5(%arg0: i32) -> (i32, i32) {
    %c0_i32 = arith.constant 0 : i32
    %c0_i32_0 = arith.constant 0 : i32
    %c0_i32_1 = arith.constant 0 : i32
    return %c0_i32, %c0_i32_0 : i32, i32
  }
  func.func @transform_6(%arg0: i32) -> (i32, i32, i32) {
    %c0_i32 = arith.constant 0 : i32
    %c0_i32_0 = arith.constant 0 : i32
    %c0_i32_1 = arith.constant 0 : i32
    return %arg0, %c0_i32, %c0_i32_0 : i32, i32, i32
  }
}

</mosaic_0001>

<llo_original>
// kernel: tpu_custom_call.1
$region0: #{tpu_custom_call.1}
  #allocation0 [shape = 'u32[]', space=smem, size = 0x4, offset = 0x4, fixed_abs, tag = 'smem constant byte address 0x4 - core index']
  #allocation1 [shape = 'u32[144,128]{1,0:T(1,128)}', space=vmem, size = 0x12000, scoped, tag = 'internal scratch']
  %s0 = inlined_call_operand.hbm [shape: f32[2,32,256], index: 0, kind: input, shape index: {}]
  %s1 = inlined_call_operand.vmem [shape: f32[2,32], index: 1, kind: input, shape index: {}]
  %s2 = inlined_call_operand.vmem [shape: f32[2,1], index: 2, kind: input, shape index: {}]
  %s3 = inlined_call_operand.vmem [shape: f32[32,2], index: 3, kind: input, shape index: {}]
  %s4 = inlined_call_operand.vmem [shape: f32[32,1], index: 4, kind: input, shape index: {}]
  %s5 = inlined_call_operand.vmem [shape: f32[1,32], index: 5, kind: input, shape index: {}]
  %s6 = inlined_call_operand.hbm [shape: f32[2,32,256], index: 6, kind: output, shape index: {}]
  %s7 = sld [smem:[#allocation0]]
  $region61: #{tpu_custom_call.1} parent=0
    _
  %s9 = ssub.s32 1, %s7
  %s10 = scalar_select 0, %s9, %s7
  $region1: #{tpu_custom_call.1} parent=0
    #allocation2 [shape = 'u8[65536]{0}', space=vmem, size = 0x10000, scoped, tag = 'input window, operand 0']
    #allocation3 [shape = 's32[2]{0}', space=sflag, size = 0x8, scoped, tag = 'scoped memory for tpu_custom_call.1']
    #allocation4 [shape = 's32[2]{0}', space=sflag, size = 0x8, scoped, tag = 'scoped memory for tpu_custom_call.1']
    #allocation5 [shape = 'u8[65536]{0}', space=vmem, size = 0x10000, scoped, tag = 'output window, operand 0']
    %11 = vsyncpa [#allocation3], 0
    %s12 = scalar_lea.sflag [#allocation3], 1
    %13 = vsyncpa %s12, 0
    %14 = vsyncpa [#allocation4], 0
    %s15 = scalar_lea.sflag [#allocation4], 1
    %16 = vsyncpa %s15, 0
    loop: start=0, step=1, limit=4
    $region2: #{tpu_custom_call.1} parent=1 // loop_pre_header
      _
    $region3: #{tpu_custom_call.1} parent=1 // loop_header
      %s18 = sphi 0, %s22
      %p19 = scmp.ge.s32.totalorder %s18, 4
      %s28 = sphi 0, %s30
      %s31 = sphi 0, %s28
      %s32 = sphi 0, %s31
      %s48 = sphi 0, %s32
      %s52 = sphi 0, %s52
      %s54 = sphi 0, %s52
      %s55 = sphi 0, %s54
      %s69 = sphi 0, %s55
      %s73 = sphi 0, %s73
      %s75 = sphi 0, %s73
      %s76 = sphi 0, %s75
      %s90 = sphi 0, %s76
      %s94 = sphi 0, %s94
      %s96 = sphi 0, %s94
      %s97 = sphi 0, %s96
      %s111 = sphi 0, %s97
      %s115 = sphi 0, %s115
      %s117 = sphi 0, %s115
      %s118 = sphi 0, %s117
      %s132 = sphi 0, %s118
      %s136 = sphi 0, %s136
      %s138 = sphi 0, %s136
      %s139 = sphi 0, %s138
      %s153 = sphi 0, %s139
      %s159 = sphi 0, %s161
      %s162 = sphi 0, %s159
      %s163 = sphi 0, %s162
      %s179 = sphi 0, %s163
    $region4: #{tpu_custom_call.1} parent=1 // loop_header_branch
      %21 = sbr.rel (%p19) target = $region8
    $region5: #{tpu_custom_call.1} parent=1 // loop_body
      %s23 = ssub.s32 %s18, 1
      %s24 = ssub.s32 %s18, 2
      %s25 = sadd.s32 %s18, 1
      %s26 = ssub.s32 %s18, %s25
      %p27 = scmp.eq.s32.totalorder %s26, 0
      %s29 = sadd.s32 %s28, 1
      %s30 = scalar_select %p27, %s28, %s29
      %p33 = pneg %p27
      %p34 = scmp.eq.s32.totalorder %s18, 1
      %p35 = por %p33, %p34
      %p36 = scmp.ne.s32.totalorder %s28, %s31
      %p37 = scmp.eq.s32.totalorder %s18, 0
      %p38 = por %p36, %p37
      %p39 = scmp.ne.s32.totalorder %s28, %s31
      %p40 = scmp.eq.s32.totalorder %s23, 1
      %p41 = por %p39, %p40
      %p42 = scmp.ne.s32.totalorder %s31, %s32
      %p43 = scmp.eq.s32.totalorder %s23, 0
      %p44 = por %p42, %p43
      %p45 = scmp.ne.s32.totalorder %s31, %s32
      %p46 = scmp.eq.s32.totalorder %s24, 1
      %p47 = por %p45, %p46
      %p49 = scmp.ne.s32.totalorder %s32, %s48
      %p50 = scmp.eq.s32.totalorder %s24, 0
      %p51 = por %p49, %p50
      %s53 = sadd.s32 %s52, 1
      %p56 = scmp.eq.s32.totalorder %s18, 1
      %p57 = scmp.ne.s32.totalorder %s52, %s54
      %p58 = scmp.eq.s32.totalorder %s18, 0
      %p59 = por %p57, %p58
      %p60 = scmp.ne.s32.totalorder %s52, %s54
      %p61 = scmp.eq.s32.totalorder %s23, 1
      %p62 = por %p60, %p61
      %p63 = scmp.ne.s32.totalorder %s54, %s55
      %p64 = scmp.eq.s32.totalorder %s23, 0
      %p65 = por %p63, %p64
      %p66 = scmp.ne.s32.totalorder %s54, %s55
      %p67 = scmp.eq.s32.totalorder %s24, 1
      %p68 = por %p66, %p67
      %p70 = scmp.ne.s32.totalorder %s55, %s69
      %p71 = scmp.eq.s32.totalorder %s24, 0
      %p72 = por %p70, %p71
      %s74 = sadd.s32 %s73, 1
      %p77 = scmp.eq.s32.totalorder %s18, 1
      %p78 = scmp.ne.s32.totalorder %s73, %s75
      %p79 = scmp.eq.s32.totalorder %s18, 0
      %p80 = por %p78, %p79
      %p81 = scmp.ne.s32.totalorder %s73, %s75
      %p82 = scmp.eq.s32.totalorder %s23, 1
      %p83 = por %p81, %p82
      %p84 = scmp.ne.s32.totalorder %s75, %s76
      %p85 = scmp.eq.s32.totalorder %s23, 0
      %p86 = por %p84, %p85
      %p87 = scmp.ne.s32.totalorder %s75, %s76
      %p88 = scmp.eq.s32.totalorder %s24, 1
      %p89 = por %p87, %p88
      %p91 = scmp.ne.s32.totalorder %s76, %s90
      %p92 = scmp.eq.s32.totalorder %s24, 0
      %p93 = por %p91, %p92
      %s95 = sadd.s32 %s94, 1
      %p98 = scmp.eq.s32.totalorder %s18, 1
      %p99 = scmp.ne.s32.totalorder %s94, %s96
      %p100 = scmp.eq.s32.totalorder %s18, 0
      %p101 = por %p99, %p100
      %p102 = scmp.ne.s32.totalorder %s94, %s96
      %p103 = scmp.eq.s32.totalorder %s23, 1
      %p104 = por %p102, %p103
      %p105 = scmp.ne.s32.totalorder %s96, %s97
      %p106 = scmp.eq.s32.totalorder %s23, 0
      %p107 = por %p105, %p106
      %p108 = scmp.ne.s32.totalorder %s96, %s97
      %p109 = scmp.eq.s32.totalorder %s24, 1
      %p110 = por %p108, %p109
      %p112 = scmp.ne.s32.totalorder %s97, %s111
      %p113 = scmp.eq.s32.totalorder %s24, 0
      %p114 = por %p112, %p113
      %s116 = sadd.s32 %s115, 1
      %p119 = scmp.eq.s32.totalorder %s18, 1
      %p120 = scmp.ne.s32.totalorder %s115, %s117
      %p121 = scmp.eq.s32.totalorder %s18, 0
      %p122 = por %p120, %p121
      %p123 = scmp.ne.s32.totalorder %s115, %s117
      %p124 = scmp.eq.s32.totalorder %s23, 1
      %p125 = por %p123, %p124
      %p126 = scmp.ne.s32.totalorder %s117, %s118
      %p127 = scmp.eq.s32.totalorder %s23, 0
      %p128 = por %p126, %p127
      %p129 = scmp.ne.s32.totalorder %s117, %s118
      %p130 = scmp.eq.s32.totalorder %s24, 1
      %p131 = por %p129, %p130
      %p133 = scmp.ne.s32.totalorder %s118, %s132
      %p134 = scmp.eq.s32.totalorder %s24, 0
      %p135 = por %p133, %p134
      %s137 = sadd.s32 %s136, 1
      %p140 = scmp.eq.s32.totalorder %s18, 1
      %p141 = scmp.ne.s32.totalorder %s136, %s138
      %p142 = scmp.eq.s32.totalorder %s18, 0
      %p143 = por %p141, %p142
      %p144 = scmp.ne.s32.totalorder %s136, %s138
      %p145 = scmp.eq.s32.totalorder %s23, 1
      %p146 = por %p144, %p145
      %p147 = scmp.ne.s32.totalorder %s138, %s139
      %p148 = scmp.eq.s32.totalorder %s23, 0
      %p149 = por %p147, %p148
      %p150 = scmp.ne.s32.totalorder %s138, %s139
      %p151 = scmp.eq.s32.totalorder %s24, 1
      %p152 = por %p150, %p151
      %p154 = scmp.ne.s32.totalorder %s139, %s153
      %p155 = scmp.eq.s32.totalorder %s24, 0
      %p156 = por %p154, %p155
      %s157 = ssub.s32 %s18, %s25
      %p158 = scmp.eq.s32.totalorder %s157, 0
      %s160 = sadd.s32 %s159, 1
      %s161 = scalar_select %p158, %s159, %s160
      %p164 = pneg %p158
      %p165 = scmp.eq.s32.totalorder %s18, 1
      %p166 = por %p164, %p165
      %p167 = scmp.ne.s32.totalorder %s159, %s162
      %p168 = scmp.eq.s32.totalorder %s18, 0
      %p169 = por %p167, %p168
      %p170 = scmp.ne.s32.totalorder %s159, %s162
      %p171 = scmp.eq.s32.totalorder %s23, 1
      %p172 = por %p170, %p171
      %p173 = scmp.ne.s32.totalorder %s162, %s163
      %p174 = scmp.eq.s32.totalorder %s23, 0
      %p175 = por %p173, %p174
      %p176 = scmp.ne.s32.totalorder %s162, %s163
      %p177 = scmp.eq.s32.totalorder %s24, 1
      %p178 = por %p176, %p177
      %p180 = scmp.ne.s32.totalorder %s163, %s179
      %p181 = scmp.eq.s32.totalorder %s24, 0
      %p182 = por %p180, %p181
      %p183 = scmp.le.s32.totalorder 1, %s18
      %p184 = scmp.lt.s32.totalorder %s18, 3
      %p185 = pnand %p183, %p184
      %p186 = pneg %p185
      // Predicated region
      $region9: #{tpu_custom_call.1} parent=5 // pred_check
        _
      $region10: #{tpu_custom_call.1} parent=5 // pred_check_branch
        %188 = sbr.rel (%p185) target = $region12
      $region11: #{tpu_custom_call.1} parent=5 // pred_region
        %s189 = ssub.s32 %s18, 1
        // Predicated region
        $region13: #{tpu_custom_call.1} parent=11 // pred_check
          %p190 = pneg %p65
        $region14: #{tpu_custom_call.1} parent=11 // pred_check_branch
          %192 = sbr.rel (%p190) target = $region16
        $region15: #{tpu_custom_call.1} parent=11 // pred_region
          _
        $region16: #{tpu_custom_call.1} parent=11 // pred_fallthru
          _
        // Predicated region
        $region17: #{tpu_custom_call.1} parent=11 // pred_check
          %p193 = pneg %p86
        $region18: #{tpu_custom_call.1} parent=11 // pred_check_branch
          %195 = sbr.rel (%p193) target = $region20
        $region19: #{tpu_custom_call.1} parent=11 // pred_region
          _
        $region20: #{tpu_custom_call.1} parent=11 // pred_fallthru
          _
        // Predicated region
        $region21: #{tpu_custom_call.1} parent=11 // pred_check
          %p196 = pneg %p107
        $region22: #{tpu_custom_call.1} parent=11 // pred_check_branch
          %198 = sbr.rel (%p196) target = $region24
        $region23: #{tpu_custom_call.1} parent=11 // pred_region
          _
        $region24: #{tpu_custom_call.1} parent=11 // pred_fallthru
          _
        // Predicated region
        $region25: #{tpu_custom_call.1} parent=11 // pred_check
          %p199 = pneg %p128
        $region26: #{tpu_custom_call.1} parent=11 // pred_check_branch
          %201 = sbr.rel (%p199) target = $region28
        $region27: #{tpu_custom_call.1} parent=11 // pred_region
          _
        $region28: #{tpu_custom_call.1} parent=11 // pred_fallthru
          _
        // Predicated region
        $region29: #{tpu_custom_call.1} parent=11 // pred_check
          %p202 = pneg %p149
        $region30: #{tpu_custom_call.1} parent=11 // pred_check_branch
          %204 = sbr.rel (%p202) target = $region32
        $region31: #{tpu_custom_call.1} parent=11 // pred_region
          _
        $region32: #{tpu_custom_call.1} parent=11 // pred_fallthru
          _
      $region12: #{tpu_custom_call.1} parent=5 // pred_fallthru
        _
      %p205 = scmp.lt.s32.totalorder %s18, 2
      // Predicated region
      $region33: #{tpu_custom_call.1} parent=5 // pred_check
        %p206 = pneg %p205
      $region34: #{tpu_custom_call.1} parent=5 // pred_check_branch
        %208 = sbr.rel (%p206) target = $region36
      $region35: #{tpu_custom_call.1} parent=5 // pred_region
        // Predicated region
        $region37: #{tpu_custom_call.1} parent=35 // pred_check
          %p209 = pneg %p38
        $region38: #{tpu_custom_call.1} parent=35 // pred_check_branch
          %211 = sbr.rel (%p209) target = $region40
        $region39: #{tpu_custom_call.1} parent=35 // pred_region
          %s212 = sand.u32 %s28, 1
          %s213 = scalar_lea.sflag [#allocation3], %s212
          %s214 = sand.u32 %s28, 1
          %s215 = smul.addr %s214, 64
          %s216 = scalar_lea.vmem [#allocation2], %s215
          %s218 = ssub.s32 1024, 1024
          %219 = vsyncadd %s213, %s218
          %s220 = smul.addr %s18, 8
          %s221 = smul.addr %s220, 128
          %s222 = scalar_lea.hbm %s0, %s221
          %s223 = sshll.u32 %s216, 4
          %s224 = int_to_ptr.vmem [resolvable:$true] %s223
          %229 = dma.hbm_to_vmem [thread:$0]  %s222, 1024, %s224, %s213, 256, 256, 16
        $region40: #{tpu_custom_call.1} parent=35 // pred_fallthru
          _
      $region36: #{tpu_custom_call.1} parent=5 // pred_fallthru
        _
      %p230 = scmp.le.s32.totalorder 1, %s18
      %p231 = scmp.lt.s32.totalorder %s18, 3
      %p232 = pnand %p230, %p231
      %p233 = pneg %p232
      // Predicated region
      $region41: #{tpu_custom_call.1} parent=5 // pred_check
        _
      $region42: #{tpu_custom_call.1} parent=5 // pred_check_branch
        %235 = sbr.rel (%p232) target = $region44
      $region43: #{tpu_custom_call.1} parent=5 // pred_region
        %s236 = ssub.s32 %s18, 1
        %s237 = sand.u32 %s31, 1
        %s238 = scalar_lea.sflag [#allocation3], %s237
        %s239 = sand.u32 %s31, 1
        %s240 = smul.addr %s239, 64
        %s241 = scalar_lea.vmem [#allocation2], %s240
        // Predicated region
        $region45: #{tpu_custom_call.1} parent=43 // pred_check
          %p242 = pneg %p44
        $region46: #{tpu_custom_call.1} parent=43 // pred_check_branch
          %244 = sbr.rel (%p242) target = $region48
        $region47: #{tpu_custom_call.1} parent=43 // pred_region
          %245 = dma.done %s238, 1024
        $region48: #{tpu_custom_call.1} parent=43 // pred_fallthru
          _
        %s246 = sand.u32 %s31, 1
        %s247 = scalar_lea.sflag [#allocation3], %s246
        %s248 = sand.u32 %s31, 1
        %s249 = smul.addr %s248, 64
        %s250 = scalar_lea.vmem [#allocation2], %s249
        %p251 = pneg %p44
        %p252 = pneg %p41
        %p253 = pneg %p65
        %p254 = pneg %p62
        %p255 = pneg %p86
        %p256 = pneg %p83
        %p257 = pneg %p107
        %p258 = pneg %p104
        %p259 = pneg %p128
        %p260 = pneg %p125
        %p261 = pneg %p149
        %p262 = pneg %p146
        %p263 = pneg %p175
        %p264 = pneg %p172
        %s265 = sand.u32 %s162, 1
        %s266 = scalar_lea.sflag [#allocation4], %s265
        %s267 = sand.u32 %s162, 1
        %s268 = smul.addr %s267, 64
        %s269 = scalar_lea.vmem [#allocation5], %s268
        %v270 = vld [vmem:[%s241] sm:$0xff]
        %v271 = vld [vmem:[%s241 + $0x8] sm:$0xff]
        %v272 = vld [vmem:[%s241 + $0x10] sm:$0xff]
        %v273 = vld [vmem:[%s241 + $0x18] sm:$0xff]
        %v274 = vld [vmem:[%s241 + $0x20] sm:$0xff]
        %v275 = vld [vmem:[%s241 + $0x28] sm:$0xff]
        %v276 = vld [vmem:[%s241 + $0x30] sm:$0xff]
        %v277 = vld [vmem:[%s241 + $0x38] sm:$0xff]
        %v278 = vadd.f32 %v270, %v271
        %279 = vadd.xlane.f32.xlu0 %v278
        %v280 = vpop.xlane.xlu0 %279
        %v281 = vadd.f32 %v272, %v273
        %282 = vadd.xlane.f32.xlu0 %v281
        %v283 = vpop.xlane.xlu0 %282
        %v284 = vadd.f32 %v274, %v275
        %285 = vadd.xlane.f32.xlu0 %v284
        %v286 = vpop.xlane.xlu0 %285
        %v287 = vadd.f32 %v276, %v277
        %288 = vadd.xlane.f32.xlu0 %v287
        %v289 = vpop.xlane.xlu0 %288
        %v290 = vmul.f32 %v280, 0.00390625
        %v291 = vmul.f32 %v283, 0.00390625
        %v292 = vmul.f32 %v286, 0.00390625
        %v293 = vmul.f32 %v289, 0.00390625
        %v294 = vld [vmem:[%s1] sm:$0x3]
        %v295 = vld [vmem:[%s2] sm:$0x3]
        %vm296 = vcmask 261120
        %v298 = vsel %vm296, %v294, 0
        %300 = vmatprep.subr.mxu0 0.0
        %301 = vmatpush1.msra.mxu0 0.0
        %302 = vmatprep.subr.mxu0 0.0
        %303 = vmatpush1.msra.mxu0 0.0
        %304 = vmatprep.subr.mxu0 0.0
        %305 = vmatpush1.msra.mxu0 0.0
        %306 = vmatprep.subr.mxu0 0.0
        %307 = vmatpush1.msra.mxu0 0.0
        %308 = vmatprep.subr.mxu0 0.0
        %309 = vmatpush1.msra.mxu0 0.0
        %310 = vmatprep.subr.mxu0 0.0
        %311 = vmatpush1.msra.mxu0 0.0
        %312 = vmatprep.subr.mxu0 0.0
        %313 = vmatpush1.msra.mxu0 0.0
        %314 = vmatprep.subr.mxu0 0.0
        %315 = vmatpush1.msra.mxu0 0.0
        %316 = vmatprep.subr.mxu0 0.0
        %317 = vmatpush1.msra.mxu0 0.0
        %318 = vmatprep.subr.mxu0 0.0
        %319 = vmatpush1.msra.mxu0 0.0
        %320 = vmatprep.subr.mxu0 0.0
        %321 = vmatpush1.msra.mxu0 0.0
        %322 = vmatprep.subr.mxu0 0.0
        %323 = vmatpush1.msra.mxu0 0.0
        %324 = vmatprep.subr.mxu0 0.0
        %325 = vmatpush1.msra.mxu0 %v293
        %326 = vmatprep.subr.mxu0 0.0
        %327 = vmatpush1.msra.mxu0 %v292
        %328 = vmatprep.subr.mxu0 0.0
        %329 = vmatpush1.msra.mxu0 %v291
        %330 = vmatprep.subr.mxu0 0.0
        %331 = vmatpush1.msra.mxu0 %v290
        %332 = vmatprep.subr.mxu0 0.0
        %333 = vmatpush2.msra.mxu0 0.0
        %334 = vmatprep.subr.mxu0 0.0
        %335 = vmatpush2.msra.mxu0 0.0
        %336 = vmatprep.subr.mxu0 0.0
        %337 = vmatpush2.msra.mxu0 0.0
        %338 = vmatprep.subr.mxu0 0.0
        %339 = vmatpush2.msra.mxu0 0.0
        %340 = vmatprep.subr.mxu0 0.0
        %341 = vmatpush2.msra.mxu0 0.0
        %342 = vmatprep.subr.mxu0 0.0
        %343 = vmatpush2.msra.mxu0 0.0
        %344 = vmatprep.subr.mxu0 0.0
        %345 = vmatpush2.msra.mxu0 0.0
        %346 = vmatprep.subr.mxu0 0.0
        %347 = vmatpush2.msra.mxu0 0.0
        %348 = vmatprep.subr.mxu0 0.0
        %349 = vmatpush2.msra.mxu0 0.0
        %350 = vmatprep.subr.mxu0 0.0
        %351 = vmatpush2.msra.mxu0 0.0
        %352 = vmatprep.subr.mxu0 0.0
        %353 = vmatpush2.msra.mxu0 0.0
        %354 = vmatprep.subr.mxu0 0.0
        %355 = vmatpush2.msra.mxu0 0.0
        %356 = vmatprep.subr.mxu0 0.0
        %357 = vmatpush2.msra.mxu0 0.0
        %358 = vmatprep.subr.mxu0 0.0
        %359 = vmatpush2.msra.mxu0 0.0
        %360 = vmatprep.subr.mxu0 0.0
        %361 = vmatpush2.msra.mxu0 0.0
        %362 = vmatprep.subr.mxu0 0.0
        %363 = vmatpush2.msra.mxu0 0.0
        %364 = vmatprep.mubr.f32.mxu0 0.0
        %365 = vmatmul.mubr.f32.gmra.mxu0 %v298
        %v366 = vpop.f32.mrf.mxu0
        %v367 = vadd.f32 %v295, %v366
        %v368 = vpop.f32.mrf.mxu0
        %369 = vdwg.mxu0
        %v370 = vmax.f32 %v367, 0.0
        %v371 = vld [vmem:[%s3] sm:$0xff]
        %v372 = vld [vmem:[%s3 + $0x8] sm:$0xff]
        %v373 = vld [vmem:[%s3 + $0x10] sm:$0xff]
        %v374 = vld [vmem:[%s3 + $0x18] sm:$0xff]
        %v375 = vld [vmem:[%s4] sm:$0xff]
        %v376 = vld [vmem:[%s4 + $0x8] sm:$0xff]
        %v377 = vld [vmem:[%s4 + $0x10] sm:$0xff]
        %v378 = vld [vmem:[%s4 + $0x18] sm:$0xff]
        %vm379 = vcmask 15360
        %v381 = vsel %vm379, %v371, 0
        %v384 = vsel %vm379, %v372, 0
        %v387 = vsel %vm379, %v373, 0
        %v390 = vsel %vm379, %v374, 0
        %vm392 = vcmask 1041408
        %v394 = vsel %vm392, %v370, 0
        %396 = vmatprep.subr.mxu0 0.0
        %397 = vmatpush1.msra.mxu0 0.0
        %398 = vmatprep.subr.mxu0 0.0
        %399 = vmatpush1.msra.mxu0 0.0
        %400 = vmatprep.subr.mxu0 0.0
        %401 = vmatpush1.msra.mxu0 0.0
        %402 = vmatprep.subr.mxu0 0.0
        %403 = vmatpush1.msra.mxu0 0.0
        %404 = vmatprep.subr.mxu0 0.0
        %405 = vmatpush1.msra.mxu0 0.0
        %406 = vmatprep.subr.mxu0 0.0
        %407 = vmatpush1.msra.mxu0 0.0
        %408 = vmatprep.subr.mxu0 0.0
        %409 = vmatpush1.msra.mxu0 0.0
        %410 = vmatprep.subr.mxu0 0.0
        %411 = vmatpush1.msra.mxu0 0.0
        %412 = vmatprep.subr.mxu0 0.0
        %413 = vmatpush1.msra.mxu0 0.0
        %414 = vmatprep.subr.mxu0 0.0
        %415 = vmatpush1.msra.mxu0 0.0
        %416 = vmatprep.subr.mxu0 0.0
        %417 = vmatpush1.msra.mxu0 0.0
        %418 = vmatprep.subr.mxu0 0.0
        %419 = vmatpush1.msra.mxu0 0.0
        %420 = vmatprep.subr.mxu0 0.0
        %421 = vmatpush1.msra.mxu0 0.0
        %422 = vmatprep.subr.mxu0 0.0
        %423 = vmatpush1.msra.mxu0 0.0
        %424 = vmatprep.subr.mxu0 0.0
        %425 = vmatpush1.msra.mxu0 0.0
        %426 = vmatprep.subr.mxu0 0.0
        %427 = vmatpush1.msra.mxu0 %v394
        %428 = vmatprep.subr.mxu0 0.0
        %429 = vmatpush2.msra.mxu0 0.0
        %430 = vmatprep.subr.mxu0 0.0
        %431 = vmatpush2.msra.mxu0 0.0
        %432 = vmatprep.subr.mxu0 0.0
        %433 = vmatpush2.msra.mxu0 0.0
        %434 = vmatprep.subr.mxu0 0.0
        %435 = vmatpush2.msra.mxu0 0.0
        %436 = vmatprep.subr.mxu0 0.0
        %437 = vmatpush2.msra.mxu0 0.0
        %438 = vmatprep.subr.mxu0 0.0
        %439 = vmatpush2.msra.mxu0 0.0
        %440 = vmatprep.subr.mxu0 0.0
        %441 = vmatpush2.msra.mxu0 0.0
        %442 = vmatprep.subr.mxu0 0.0
        %443 = vmatpush2.msra.mxu0 0.0
        %444 = vmatprep.subr.mxu0 0.0
        %445 = vmatpush2.msra.mxu0 0.0
        %446 = vmatprep.subr.mxu0 0.0
        %447 = vmatpush2.msra.mxu0 0.0
        %448 = vmatprep.subr.mxu0 0.0
        %449 = vmatpush2.msra.mxu0 0.0
        %450 = vmatprep.subr.mxu0 0.0
        %451 = vmatpush2.msra.mxu0 0.0
        %452 = vmatprep.subr.mxu0 0.0
        %453 = vmatpush2.msra.mxu0 0.0
        %454 = vmatprep.subr.mxu0 0.0
        %455 = vmatpush2.msra.mxu0 0.0
        %456 = vmatprep.subr.mxu0 0.0
        %457 = vmatpush2.msra.mxu0 0.0
        %458 = vmatprep.subr.mxu0 0.0
        %459 = vmatpush2.msra.mxu0 0.0
        %460 = vmatprep.mubr.f32.mxu0 0.0
        %461 = vmatmul.mubr.f32.gmra.mxu0 %v381
        %v462 = vpop.f32.mrf.mxu0
        %v463 = vadd.f32 %v375, %v462
        %v464 = vpop.f32.mrf.mxu0
        %465 = vmatprep.mubr.f32.mxu0 0.0
        %466 = vmatmul.mubr.f32.gmra.mxu0 %v384
        %v467 = vpop.f32.mrf.mxu0
        %v468 = vadd.f32 %v376, %v467
        %v469 = vpop.f32.mrf.mxu0
        %470 = vmatprep.mubr.f32.mxu0 0.0
        %471 = vmatmul.mubr.f32.gmra.mxu0 %v387
        %v472 = vpop.f32.mrf.mxu0
        %v473 = vadd.f32 %v377, %v472
        %v474 = vpop.f32.mrf.mxu0
        %475 = vmatprep.mubr.f32.mxu0 0.0
        %476 = vmatmul.mubr.f32.gmra.mxu0 %v390
        %v477 = vpop.f32.mrf.mxu0
        %v478 = vadd.f32 %v378, %v477
        %v479 = vpop.f32.mrf.mxu0
        %480 = vdwg.mxu0
        %v481 = vmul.f32 %v463, 0.5
        %v482 = vmul.f32 %v468, 0.5
        %v483 = vmul.f32 %v473, 0.5
        %v484 = vmul.f32 %v478, 0.5
        %v485 = vtanh.pop %v481
        %v486 = vtanh.pop %v482
        %v487 = vtanh.pop %v483
        %v488 = vtanh.pop %v484
        %v489 = vmul.f32 %v485, 0.5
        %v490 = vmul.f32 %v486, 0.5
        %v491 = vmul.f32 %v487, 0.5
        %v492 = vmul.f32 %v488, 0.5
        %v493 = vadd.f32 %v489, 0.5
        %v494 = vadd.f32 %v490, 0.5
        %v495 = vadd.f32 %v491, 0.5
        %v496 = vadd.f32 %v492, 0.5
        %v497 = vld [vmem:[%s5] sm:$0x1]
        %v499 = vsel %vm296, %v497, 0
        %501 = vmatprep.subr.mxu0 0.0
        %502 = vmatpush1.msra.mxu0 0.0
        %503 = vmatprep.subr.mxu0 0.0
        %504 = vmatpush1.msra.mxu0 0.0
        %505 = vmatprep.subr.mxu0 0.0
        %506 = vmatpush1.msra.mxu0 0.0
        %507 = vmatprep.subr.mxu0 0.0
        %508 = vmatpush1.msra.mxu0 0.0
        %509 = vmatprep.subr.mxu0 0.0
        %510 = vmatpush1.msra.mxu0 0.0
        %511 = vmatprep.subr.mxu0 0.0
        %512 = vmatpush1.msra.mxu0 0.0
        %513 = vmatprep.subr.mxu0 0.0
        %514 = vmatpush1.msra.mxu0 0.0
        %515 = vmatprep.subr.mxu0 0.0
        %516 = vmatpush1.msra.mxu0 0.0
        %517 = vmatprep.subr.mxu0 0.0
        %518 = vmatpush1.msra.mxu0 0.0
        %519 = vmatprep.subr.mxu0 0.0
        %520 = vmatpush1.msra.mxu0 0.0
        %521 = vmatprep.subr.mxu0 0.0
        %522 = vmatpush1.msra.mxu0 0.0
        %523 = vmatprep.subr.mxu0 0.0
        %524 = vmatpush1.msra.mxu0 0.0
        %525 = vmatprep.subr.mxu0 %v277
        %526 = vmatpush1.msra.mxu0 %v276
        %527 = vmatprep.subr.mxu0 %v275
        %528 = vmatpush1.msra.mxu0 %v274
        %529 = vmatprep.subr.mxu0 %v273
        %530 = vmatpush1.msra.mxu0 %v272
        %531 = vmatprep.subr.mxu0 %v271
        %532 = vmatpush1.msra.mxu0 %v270
        %533 = vmatprep.subr.mxu0 0.0
        %534 = vmatpush2.msra.mxu0 0.0
        %535 = vmatprep.subr.mxu0 0.0
        %536 = vmatpush2.msra.mxu0 0.0
        %537 = vmatprep.subr.mxu0 0.0
        %538 = vmatpush2.msra.mxu0 0.0
        %539 = vmatprep.subr.mxu0 0.0
        %540 = vmatpush2.msra.mxu0 0.0
        %541 = vmatprep.subr.mxu0 0.0
        %542 = vmatpush2.msra.mxu0 0.0
        %543 = vmatprep.subr.mxu0 0.0
        %544 = vmatpush2.msra.mxu0 0.0
        %545 = vmatprep.subr.mxu0 0.0
        %546 = vmatpush2.msra.mxu0 0.0
        %547 = vmatprep.subr.mxu0 0.0
        %548 = vmatpush2.msra.mxu0 0.0
        %549 = vmatprep.subr.mxu0 0.0
        %550 = vmatpush2.msra.mxu0 0.0
        %551 = vmatprep.subr.mxu0 0.0
        %552 = vmatpush2.msra.mxu0 0.0
        %553 = vmatprep.subr.mxu0 0.0
        %554 = vmatpush2.msra.mxu0 0.0
        %555 = vmatprep.subr.mxu0 0.0
        %556 = vmatpush2.msra.mxu0 0.0
        %557 = vmatprep.subr.mxu0 0.0
        %558 = vmatpush2.msra.mxu0 0.0
        %559 = vmatprep.subr.mxu0 0.0
        %560 = vmatpush2.msra.mxu0 0.0
        %561 = vmatprep.subr.mxu0 0.0
        %562 = vmatpush2.msra.mxu0 0.0
        %563 = vmatprep.subr.mxu0 0.0
        %564 = vmatpush2.msra.mxu0 0.0
        %565 = vmatprep.mubr.f32.mxu0 0.0
        %566 = vmatmul.mubr.f32.gmra.mxu0 %v499
        %v567 = vpop.f32.mrf.mxu0
        %v568 = vadd.f32 0.0, %v567
        %v569 = vpop.f32.mrf.mxu0
        %v570 = vadd.f32 0.0, %v569
        %571 = vdwg.mxu0
        %v572 = vmul.f32 %v568, 0.5
        %v573 = vmul.f32 %v570, 0.5
        %v574 = vtanh.pop %v572
        %v575 = vtanh.pop %v573
        %v576 = vmul.f32 %v574, 0.5
        %v577 = vmul.f32 %v575, 0.5
        %v578 = vadd.f32 %v576, 0.5
        %v579 = vadd.f32 %v577, 0.5
        %581 = vset.pattern.permute.xlu0 0
        %582 = vperm.xlu0 %581, %v493
        %v583 = vpop.permute.xlu0 %582
        %586 = vset.pattern.permute.xlu0 0
        %587 = vperm.xlu0 %586, %v494
        %v588 = vpop.permute.xlu0 %587
        %591 = vset.pattern.permute.xlu0 0
        %592 = vperm.xlu0 %591, %v495
        %v593 = vpop.permute.xlu0 %592
        %596 = vset.pattern.permute.xlu0 0
        %597 = vperm.xlu0 %596, %v496
        %v598 = vpop.permute.xlu0 %597
        %v600 = vlaneseq
        %v601 = vshrl.u32 %v600, 7
        %v602 = vsub.s32 0, %v601
        %v603 = vrot.slane %v578, %v602
        %v604 = vlaneseq
        %v605 = vshrl.u32 %v604, 7
        %v606 = vsub.s32 0, %v605
        %v607 = vrot.slane %v579, %v606
        %v608 = vadd.f32 %v583, %v603
        %v609 = vadd.f32 %v583, %v607
        %v610 = vadd.f32 %v588, %v603
        %v611 = vadd.f32 %v588, %v607
        %v612 = vadd.f32 %v593, %v603
        %v613 = vadd.f32 %v593, %v607
        %v614 = vadd.f32 %v598, %v603
        %v615 = vadd.f32 %v598, %v607
        %v616 = vmul.f32 %v270, %v608
        %v617 = vmul.f32 %v271, %v609
        %v618 = vmul.f32 %v272, %v610
        %v619 = vmul.f32 %v273, %v611
        %v620 = vmul.f32 %v274, %v612
        %v621 = vmul.f32 %v275, %v613
        %v622 = vmul.f32 %v276, %v614
        %v623 = vmul.f32 %v277, %v615
        %624 = vst [vmem:[%s269] sm:$0xff] %v616
        %625 = vst [vmem:[%s269 + $0x8] sm:$0xff] %v617
        %626 = vst [vmem:[%s269 + $0x10] sm:$0xff] %v618
        %627 = vst [vmem:[%s269 + $0x18] sm:$0xff] %v619
        %628 = vst [vmem:[%s269 + $0x20] sm:$0xff] %v620
        %629 = vst [vmem:[%s269 + $0x28] sm:$0xff] %v621
        %630 = vst [vmem:[%s269 + $0x30] sm:$0xff] %v622
        %631 = vst [vmem:[%s269 + $0x38] sm:$0xff] %v623
        %s632 = sand.u32 %s162, 1
        %s633 = scalar_lea.sflag [#allocation4], %s632
        %s634 = sand.u32 %s162, 1
        %s635 = smul.addr %s634, 64
        %s636 = scalar_lea.vmem [#allocation5], %s635
        // Predicated region
        $region49: #{tpu_custom_call.1} parent=43 // pred_check
          %p637 = pneg %p172
        $region50: #{tpu_custom_call.1} parent=43 // pred_check_branch
          %639 = sbr.rel (%p637) target = $region52
        $region51: #{tpu_custom_call.1} parent=43 // pred_region
          %s641 = ssub.s32 1024, 1024
          %642 = vsyncadd %s633, %s641
          %s643 = smul.addr %s23, 8
          %s644 = smul.addr %s643, 128
          %s645 = scalar_lea.hbm %s6, %s644
          %s646 = sshll.u32 %s636, 4
          %s647 = int_to_ptr.vmem [resolvable:$true] %s646
          %652 = dma.vmem_to_hbm [thread:$0]  %s647, 1024, %s645, %s633, 256, 256, 16
        $region52: #{tpu_custom_call.1} parent=43 // pred_fallthru
          _
      $region44: #{tpu_custom_call.1} parent=5 // pred_fallthru
        _
      %p653 = scmp.le.s32.totalorder 2, %s18
      // Predicated region
      $region53: #{tpu_custom_call.1} parent=5 // pred_check
        %p654 = pneg %p653
      $region54: #{tpu_custom_call.1} parent=5 // pred_check_branch
        %656 = sbr.rel (%p654) target = $region56
      $region55: #{tpu_custom_call.1} parent=5 // pred_region
        %s657 = ssub.s32 %s18, 2
        // Predicated region
        $region57: #{tpu_custom_call.1} parent=55 // pred_check
          %p658 = pneg %p178
        $region58: #{tpu_custom_call.1} parent=55 // pred_check_branch
          %660 = sbr.rel (%p658) target = $region60
        $region59: #{tpu_custom_call.1} parent=55 // pred_region
          %s661 = sand.u32 %s163, 1
          %s662 = scalar_lea.sflag [#allocation4], %s661
          %s663 = sand.u32 %s163, 1
          %s664 = smul.addr %s663, 64
          %s665 = scalar_lea.vmem [#allocation5], %s664
          %666 = dma.done %s662, 1024
        $region60: #{tpu_custom_call.1} parent=55 // pred_fallthru
          _
      $region56: #{tpu_custom_call.1} parent=5 // pred_fallthru
        _
    $region6: #{tpu_custom_call.1} parent=1 // loop_footer
      %s22 = sadd.s32 1, %s18
    $region7: #{tpu_custom_call.1} parent=1 // loop_footer_branch
      %17 = sbr.rel target = $region3
    $region8: #{tpu_custom_call.1} parent=1 // loop_exit
      _
    %667 = vsyncpa [#allocation3], 1
    %s668 = scalar_lea.sflag [#allocation3], 1
    %669 = vsyncpa %s668, 1
    %670 = vsyncpa [#allocation4], 1
    %s671 = scalar_lea.sflag [#allocation4], 1
    %672 = vsyncpa %s671, 1

</llo_original>
